<compile_context>
chip_gen: v7x
topology: tpu7x:2x2x1
jax: 0.10.0
libtpu: 0.0.40
codegen_flags: <defaults>
</compile_context>

<pallas_src>
import functools
import math

import jax
import jax.numpy as jnp
import numpy as np
from jax import lax
from jax.experimental import pallas as pl
from jax.experimental.pallas import tpu as pltpu


def _cdiv(a, b):
    return -(-a // b)


def _discriminator_kernel(x_ref,
                          w1_ref, b1_ref, w2_ref, b2_ref,
                          w3_ref, b3_ref, w4_ref, b4_ref,
                          out_ref, tap_ref, *, L, compute_dtype):
    """One grid step: B trajectories flattened to M = B*L lane positions.

    x_ref  : (2, M)      channels-major input block (f32)
    w1_ref : (32, 8)     layer-1 tap-fused weight (K padded 6 -> 8 with zeros)
    w{2,3,4}_ref: (Cout, 3*Cin)  tap-fused weights
    b*_ref : (Cout, 1)   biases (f32)
    out_ref: (1, 1, M)
    tap_ref: (192, M)    persistent VMEM scratch holding [h[m-1]; h[m]; h[m+1]]
    """
    x = x_ref[...]                       # (2, M) f32
    M = x.shape[-1]
    cd = compute_dtype

    # Trajectory-boundary masks: zero the conv padding taps at l==0 / l==L-1.
    l_idx = lax.broadcasted_iota(jnp.int32, (1, M), 1) % L
    not_first = (l_idx != 0).astype(jnp.float32)          # (1, M)
    not_last = (l_idx != (L - 1)).astype(jnp.float32)      # (1, M)

    def taps(h):
        # h[:, m-1] and h[:, m+1] with zero padding at trajectory boundaries.
        h_m1 = pltpu.roll(h, shift=1, axis=1) * not_first
        h_p1 = pltpu.roll(h, shift=M - 1, axis=1) * not_last
        return h_m1, h_p1

    # ---- Layer 1 (Cin=2): one fused (32, 8) @ (8, M) matmul -----------------
    x_m1, x_p1 = taps(x)
    x_cat = jnp.concatenate(
        [x_m1, x, x_p1, jnp.zeros((2, M), jnp.float32)], axis=0).astype(cd)  # (8, M)
    h = jnp.dot(w1_ref[...], x_cat, preferred_element_type=jnp.float32)
    h = jnp.maximum(h + b1_ref[...], 0.0)                  # (32, M) f32

    # ---- Layers 2-4: taps written straight into the persistent scratch ------
    def fused_layer(h, w_ref, b_ref, relu):
        cin = h.shape[0]                                    # 32 or 64 (aligned)
        h_m1, h_p1 = taps(h)
        tap_ref[0:cin, :] = h_m1.astype(cd)
        tap_ref[cin:2 * cin, :] = h.astype(cd)
        tap_ref[2 * cin:3 * cin, :] = h_p1.astype(cd)
        y = jnp.dot(w_ref[...], tap_ref[0:3 * cin, :],
                    preferred_element_type=jnp.float32) + b_ref[...]
        return jnp.maximum(y, 0.0) if relu else y

    h = fused_layer(h, w2_ref, b2_ref, relu=True)           # (64, M)
    h = fused_layer(h, w3_ref, b3_ref, relu=True)           # (32, M)
    y = fused_layer(h, w4_ref, b4_ref, relu=False)          # (1, M)

    out_ref[0, :, :] = y                                    # lane-dense store


def _pick_batch_block(N, L, target_rows=8192, max_rows=16384):
    """Trajectories per grid step; B*L is a multiple of 128, ~target_rows wide."""
    b_unit = 128 // math.gcd(L, 128)      # smallest B with (B*L) % 128 == 0
    unit_rows = b_unit * L
    n_units = max(1, min(target_rows, max_rows) // unit_rows)
    B = b_unit * n_units
    # Never exceed the (padded) batch.
    B = min(B, b_unit * _cdiv(N, b_unit))
    # Prefer >= 2 grid steps so the "parallel" axis can shard across v7x's 2 TCs.
    if _cdiv(N, B) < 2:
        half_units = max(1, _cdiv(_cdiv(N, 2), b_unit))
        B = min(B, b_unit * half_units)
    return max(B, b_unit)


def discriminator_forward(traj, traj_rel, params, *, use_bf16=False,
                          target_rows=8192, max_rows=16384):
    """traj: unused by the PyTorch forward (kept for signature parity).
    traj_rel: (N, L, 2) f32.  Returns (N, L) f32 (== output.squeeze() for N>1).
    """
    del traj  # not used in the reference forward
    N, L, C = traj_rel.shape
    assert C == 2
    (w1, b1), (w2, b2), (w3, b3), (w4, b4) = params

    compute_dtype = jnp.bfloat16 if use_bf16 else jnp.float32
    if use_bf16:
        # bf16 matmul operands (native MXU path on v6e/v7x); biases stay f32.
        w1, w2, w3, w4 = (w.astype(jnp.bfloat16) for w in (w1, w2, w3, w4))

    B = _pick_batch_block(N, L, target_rows=target_rows, max_rows=max_rows)
    num_blocks = _cdiv(N, B)
    N_pad = num_blocks * B
    M = B * L

    # Channels-major, flattened input (2, N_pad * L); m = n*L + l.
    x = jnp.transpose(traj_rel, (2, 0, 1)).reshape(2, N * L)
    if N_pad != N:
        # Padded trajectories are all-zero; their (harmless) outputs are sliced
        # off below.  For tiny N with large b_unit this wastes up to b_unit/N of
        # the MXU work -- acceptable for this model size.
        x = jnp.pad(x, ((0, 0), (0, (N_pad - N) * L)))

    def full_spec(a):
        nd = a.ndim
        return pl.BlockSpec(a.shape, lambda i, _nd=nd: (0,) * _nd)

    kernel = functools.partial(_discriminator_kernel, L=L,
                               compute_dtype=compute_dtype)

    out = pl.pallas_call(
        kernel,
        out_shape=jax.ShapeDtypeStruct((num_blocks, 1, M), jnp.float32),
        grid_spec=pltpu.PrefetchScalarGridSpec(
            num_scalar_prefetch=0,
            grid=(num_blocks,),
            in_specs=[
                pl.BlockSpec((2, M), lambda i: (0, i)),
                full_spec(w1), full_spec(b1),
                full_spec(w2), full_spec(b2),
                full_spec(w3), full_spec(b3),
                full_spec(w4), full_spec(b4),
            ],
            out_specs=pl.BlockSpec((1, 1, M), lambda i: (i, 0, 0)),
            scratch_shapes=[pltpu.VMEM((192, M), compute_dtype)],
        ),
        compiler_params=pltpu.CompilerParams(
            dimension_semantics=("parallel",),
            vmem_limit_bytes=48 * 1024 * 1024,   # fits v7x's 64 MiB physical VMEM
        ),
    )(x, w1, b1, w2, b2, w3, b3, w4, b4)

    # (num_blocks, 1, M) -> (N_pad, L) -> (N, L); == output.squeeze() for N > 1.
    return out.reshape(N_pad, L)[:N]


def make_params(key, d_conv_dim=64, k=3):
    """Deterministic synthetic weights.
    PyTorch Conv1d weight layout is (Cout, Cin, K).
    Kernel layout: tap-fused (Cout, K*Cin) with column blocks ordered
    [k=0 | k=1 | k=2] (matching the kernel concat [h[m-1], h[m], h[m+1]]);
    layer 1 additionally zero-padded from K*Cin=6 to 8 columns; biases (Cout, 1)."""
    dims = [(2, d_conv_dim // 2), (d_conv_dim // 2, d_conv_dim),
            (d_conv_dim, d_conv_dim // 2), (d_conv_dim // 2, 1)]
    keys = jax.random.split(key, 2 * len(dims))
    kernel_params = []
    torch_params = []  # keep (Cout, Cin, K) for the pure-JAX reference
    for idx, (cin, cout) in enumerate(dims):
        w_t = 0.1 * jax.random.normal(keys[2 * idx], (cout, cin, k), jnp.float32)
        b = 0.1 * jax.random.normal(keys[2 * idx + 1], (cout,), jnp.float32)
        torch_params.append((w_t, b))
        w_f = jnp.transpose(w_t, (0, 2, 1)).reshape(cout, k * cin)  # (Cout, K*Cin)
        if idx == 0:
            w_f = jnp.concatenate(
                [w_f, jnp.zeros((cout, 2), jnp.float32)], axis=1)   # (32, 8)
        kernel_params.append((w_f, b.reshape(cout, 1)))
    return kernel_params, torch_params


def reference_forward(traj_rel, torch_params):
    """Pure-JAX reference mirroring the PyTorch module (NCL conv)."""
    x = jnp.transpose(traj_rel, (0, 2, 1))  # (N, 2, L)
    relu_flags = [True, True, True, False]
    for (w, b), relu in zip(torch_params, relu_flags):
        x = lax.conv_general_dilated(
            x, w, window_strides=(1,), padding=((1, 1),),
            dimension_numbers=("NCH", "OIH", "NCH"),
        ) + b[None, :, None]
        if relu:
            x = jnp.maximum(x, 0.0)
    return jnp.squeeze(x)  # (N, L) for N > 1


if __name__ == "__main__":
    key = jax.random.PRNGKey(0)
    k_p, k_traj, k_rel, k_rel2 = jax.random.split(key, 4)

    params, torch_params = make_params(k_p)

    # Small shapes consistent with the module: N trajectories of length L, 2-D rel coords.
    N, L = 2, 16
    traj = jax.random.normal(k_traj, (N, L, 2), jnp.float32)      # unused by forward
    traj_rel = jax.random.normal(k_rel, (N, L, 2), jnp.float32)

    out = jax.block_until_ready(discriminator_forward(traj, traj_rel, params))
    ref = reference_forward(traj_rel, torch_params)
    np.testing.assert_allclose(np.asarray(out), np.asarray(ref), rtol=1e-4, atol=1e-4)

    # L not dividing 128 exercises the padding / boundary-mask paths.
    N2, L2 = 6, 20
    traj_rel2 = jax.random.normal(k_rel2, (N2, L2, 2), jnp.float32)
    out2 = jax.block_until_ready(discriminator_forward(None, traj_rel2, params))
    ref2 = reference_forward(traj_rel2, torch_params)
    np.testing.assert_allclose(np.asarray(out2), np.asarray(ref2), rtol=1e-4, atol=1e-4)

    # Optional bf16 MXU fast path (v6e/v7x); relaxed tolerance vs the f32 reference.
    out2_bf16 = jax.block_until_ready(
        discriminator_forward(None, traj_rel2, params, use_bf16=True))
    np.testing.assert_allclose(np.asarray(out2_bf16), np.asarray(ref2),
                               rtol=1e-1, atol=1e-1)

    print("KERNEL_OK")
</pallas_src>

<mosaic_0001>
module attributes {stable_mosaic.version = 11 : i64} {
  func.func @_discriminator_kernel(%arg0: i32, %arg1: memref<2x128xf32, #tpu.memory_space<vmem>>, %arg2: memref<32x8xf32, #tpu.memory_space<vmem>>, %arg3: memref<32x1xf32, #tpu.memory_space<vmem>>, %arg4: memref<64x96xf32, #tpu.memory_space<vmem>>, %arg5: memref<64x1xf32, #tpu.memory_space<vmem>>, %arg6: memref<32x192xf32, #tpu.memory_space<vmem>>, %arg7: memref<32x1xf32, #tpu.memory_space<vmem>>, %arg8: memref<1x96xf32, #tpu.memory_space<vmem>>, %arg9: memref<1x1xf32, #tpu.memory_space<vmem>>, %arg10: memref<1x1x128xf32, #tpu.memory_space<vmem>>, %arg11: memref<192x128xf32, #tpu.memory_space<vmem>>) attributes {dimension_semantics = [#tpu.dimension_semantics<parallel>], iteration_bounds = array<i64: 1>, scalar_prefetch = 0 : i64, scratch_operands = 1 : i64, tpu.core_type = #tpu.core_type<tc>, window_params = [{transform_indices = @transform_0, window_bounds = array<i64: 2, 128>}, {pipeline_mode = #tpu.pipeline_mode<synchronous>, transform_indices = @transform_1, window_bounds = array<i64: 32, 8>}, {pipeline_mode = #tpu.pipeline_mode<synchronous>, transform_indices = @transform_2, window_bounds = array<i64: 32, 1>}, {pipeline_mode = #tpu.pipeline_mode<synchronous>, transform_indices = @transform_3, window_bounds = array<i64: 64, 96>}, {pipeline_mode = #tpu.pipeline_mode<synchronous>, transform_indices = @transform_4, window_bounds = array<i64: 64, 1>}, {pipeline_mode = #tpu.pipeline_mode<synchronous>, transform_indices = @transform_5, window_bounds = array<i64: 32, 192>}, {pipeline_mode = #tpu.pipeline_mode<synchronous>, transform_indices = @transform_6, window_bounds = array<i64: 32, 1>}, {pipeline_mode = #tpu.pipeline_mode<synchronous>, transform_indices = @transform_7, window_bounds = array<i64: 1, 96>}, {pipeline_mode = #tpu.pipeline_mode<synchronous>, transform_indices = @transform_8, window_bounds = array<i64: 1, 1>}, {transform_indices = @transform_9, window_bounds = array<i64: 1, 1, 128>}]} {
    %c0 = arith.constant 0 : index
    %c0_0 = arith.constant 0 : index
    %0 = vector.load %arg1[%c0, %c0_0] : memref<2x128xf32, #tpu.memory_space<vmem>>, vector<2x128xf32>
    %1 = tpu.iota {dimensions = array<i32: 1>} : vector<1x128xi32>
    %c16_i32 = arith.constant 16 : i32
    %c0_i32 = arith.constant 0 : i32
    %2 = arith.cmpi eq, %c16_i32, %c0_i32 : i32
    %c1_i32 = arith.constant 1 : i32
    %3 = arith.select %2, %c1_i32, %c16_i32 : i32
    %4 = vector.broadcast %3 : i32 to vector<1x128xi32>
    %5 = arith.remsi %1, %4 : vector<1x128xi32>
    %c0_i32_1 = arith.constant 0 : i32
    %6 = vector.broadcast %c0_i32_1 : i32 to vector<1x128xi32>
    %7 = arith.cmpi ne, %5, %6 : vector<1x128xi32>
    %c0_i32_2 = arith.constant 0 : i32
    %8 = vector.broadcast %c0_i32_2 : i32 to vector<1x128xi32>
    %9 = arith.cmpi slt, %5, %8 : vector<1x128xi32>
    %c0_i32_3 = arith.constant 0 : i32
    %10 = arith.cmpi slt, %3, %c0_i32_3 : i32
    %11 = vector.broadcast %10 : i1 to vector<1x128xi1>
    %12 = vector.broadcast %11 : vector<1x128xi1> to vector<1x128xi1>
    %13 = arith.xori %9, %12 : vector<1x128xi1>
    %14 = arith.andi %13, %7 : vector<1x128xi1>
    %15 = vector.broadcast %3 : i32 to vector<1x128xi32>
    %16 = arith.addi %5, %15 : vector<1x128xi32>
    %17 = arith.select %14, %16, %5 : vector<1x128xi1>, vector<1x128xi32>
    %c0_i32_4 = arith.constant 0 : i32
    %18 = vector.broadcast %c0_i32_4 : i32 to vector<1x128xi32>
    %19 = arith.cmpi ne, %17, %18 : vector<1x128xi32>
    %20 = arith.extui %19 : vector<1x128xi1> to vector<1x128xi32>
    %21 = arith.sitofp %20 : vector<1x128xi32> to vector<1x128xf32>
    %c15_i32 = arith.constant 15 : i32
    %22 = vector.broadcast %c15_i32 : i32 to vector<1x128xi32>
    %23 = arith.cmpi ne, %17, %22 : vector<1x128xi32>
    %24 = arith.extui %23 : vector<1x128xi1> to vector<1x128xi32>
    %25 = arith.sitofp %24 : vector<1x128xi32> to vector<1x128xf32>
    %c1_i32_5 = arith.constant 1 : i32
    %26 = tpu.dynamic_rotate %0 by %c1_i32_5 dim 1 : vector<2x128xf32>, i32 -> vector<2x128xf32>
    %27 = vector.broadcast %21 : vector<1x128xf32> to vector<2x128xf32>
    %28 = arith.mulf %26, %27 : vector<2x128xf32>
    %c127_i32 = arith.constant 127 : i32
    %29 = tpu.dynamic_rotate %0 by %c127_i32 dim 1 : vector<2x128xf32>, i32 -> vector<2x128xf32>
    %30 = vector.broadcast %25 : vector<1x128xf32> to vector<2x128xf32>
    %31 = arith.mulf %29, %30 : vector<2x128xf32>
    %cst = arith.constant 0.000000e+00 : f32
    %32 = vector.broadcast %cst : f32 to vector<2x128xf32>
    %33 = tpu.concatenate %28, %0, %31, %32 in 0 : vector<2x128xf32>, vector<2x128xf32>, vector<2x128xf32>, vector<2x128xf32> -> vector<8x128xf32>
    %c0_6 = arith.constant 0 : index
    %c0_7 = arith.constant 0 : index
    %34 = vector.load %arg2[%c0_6, %c0_7] : memref<32x8xf32, #tpu.memory_space<vmem>>, vector<32x8xf32>
    %cst_8 = arith.constant dense<0.000000e+00> : vector<32x128xf32>
    %35 = tpu.matmul %34, %33, %cst_8 {dimension_numbers = #tpu.dot_dimension_numbers<[1], [0], [0], [1], [0, 0, 1, 1], [], []>} : vector<32x8xf32>, vector<8x128xf32>, vector<32x128xf32> -> vector<32x128xf32>
    %c0_9 = arith.constant 0 : index
    %c0_10 = arith.constant 0 : index
    %36 = vector.load %arg3[%c0_9, %c0_10] : memref<32x1xf32, #tpu.memory_space<vmem>>, vector<32x1xf32>
    %37 = vector.broadcast %36 : vector<32x1xf32> to vector<32x128xf32>
    %38 = arith.addf %35, %37 : vector<32x128xf32>
    %cst_11 = arith.constant 0.000000e+00 : f32
    %39 = vector.broadcast %cst_11 : f32 to vector<32x128xf32>
    %40 = arith.maximumf %38, %39 : vector<32x128xf32>
    %c1_i32_12 = arith.constant 1 : i32
    %41 = tpu.dynamic_rotate %40 by %c1_i32_12 dim 1 : vector<32x128xf32>, i32 -> vector<32x128xf32>
    %42 = vector.broadcast %21 : vector<1x128xf32> to vector<32x128xf32>
    %43 = arith.mulf %41, %42 : vector<32x128xf32>
    %c127_i32_13 = arith.constant 127 : i32
    %44 = tpu.dynamic_rotate %40 by %c127_i32_13 dim 1 : vector<32x128xf32>, i32 -> vector<32x128xf32>
    %45 = vector.broadcast %25 : vector<1x128xf32> to vector<32x128xf32>
    %46 = arith.mulf %44, %45 : vector<32x128xf32>
    %c0_14 = arith.constant 0 : index
    %c0_15 = arith.constant 0 : index
    %47 = vector.load %arg11[%c0_14, %c0_15] : memref<192x128xf32, #tpu.memory_space<vmem>>, vector<32x128xf32>
    tpu.vector_store %arg11[%c0_14, %c0_15], %43 {strides = array<i32>} : memref<192x128xf32, #tpu.memory_space<vmem>>, vector<32x128xf32>,
    %c32 = arith.constant 32 : index
    %c0_16 = arith.constant 0 : index
    %48 = vector.load %arg11[%c32, %c0_16] : memref<192x128xf32, #tpu.memory_space<vmem>>, vector<32x128xf32>
    tpu.vector_store %arg11[%c32, %c0_16], %40 {strides = array<i32>} : memref<192x128xf32, #tpu.memory_space<vmem>>, vector<32x128xf32>,
    %c64 = arith.constant 64 : index
    %c0_17 = arith.constant 0 : index
    %49 = vector.load %arg11[%c64, %c0_17] : memref<192x128xf32, #tpu.memory_space<vmem>>, vector<32x128xf32>
    tpu.vector_store %arg11[%c64, %c0_17], %46 {strides = array<i32>} : memref<192x128xf32, #tpu.memory_space<vmem>>, vector<32x128xf32>,
    %c0_18 = arith.constant 0 : index
    %c0_19 = arith.constant 0 : index
    %50 = vector.load %arg4[%c0_18, %c0_19] : memref<64x96xf32, #tpu.memory_space<vmem>>, vector<64x96xf32>
    %c0_20 = arith.constant 0 : index
    %c0_21 = arith.constant 0 : index
    %51 = vector.load %arg11[%c0_20, %c0_21] : memref<192x128xf32, #tpu.memory_space<vmem>>, vector<96x128xf32>
    %cst_22 = arith.constant dense<0.000000e+00> : vector<64x128xf32>
    %52 = tpu.matmul %50, %51, %cst_22 {dimension_numbers = #tpu.dot_dimension_numbers<[1], [0], [0], [1], [0, 0, 1, 1], [], []>} : vector<64x96xf32>, vector<96x128xf32>, vector<64x128xf32> -> vector<64x128xf32>
    %c0_23 = arith.constant 0 : index
    %c0_24 = arith.constant 0 : index
    %53 = vector.load %arg5[%c0_23, %c0_24] : memref<64x1xf32, #tpu.memory_space<vmem>>, vector<64x1xf32>
    %54 = vector.broadcast %53 : vector<64x1xf32> to vector<64x128xf32>
    %55 = arith.addf %52, %54 : vector<64x128xf32>
    %cst_25 = arith.constant 0.000000e+00 : f32
    %56 = vector.broadcast %cst_25 : f32 to vector<64x128xf32>
    %57 = arith.maximumf %55, %56 : vector<64x128xf32>
    %c1_i32_26 = arith.constant 1 : i32
    %58 = tpu.dynamic_rotate %57 by %c1_i32_26 dim 1 : vector<64x128xf32>, i32 -> vector<64x128xf32>
    %59 = vector.broadcast %21 : vector<1x128xf32> to vector<64x128xf32>
    %60 = arith.mulf %58, %59 : vector<64x128xf32>
    %c127_i32_27 = arith.constant 127 : i32
    %61 = tpu.dynamic_rotate %57 by %c127_i32_27 dim 1 : vector<64x128xf32>, i32 -> vector<64x128xf32>
    %62 = vector.broadcast %25 : vector<1x128xf32> to vector<64x128xf32>
    %63 = arith.mulf %61, %62 : vector<64x128xf32>
    %c0_28 = arith.constant 0 : index
    %c0_29 = arith.constant 0 : index
    %64 = vector.load %arg11[%c0_28, %c0_29] : memref<192x128xf32, #tpu.memory_space<vmem>>, vector<64x128xf32>
    tpu.vector_store %arg11[%c0_28, %c0_29], %60 {strides = array<i32>} : memref<192x128xf32, #tpu.memory_space<vmem>>, vector<64x128xf32>,
    %c64_30 = arith.constant 64 : index
    %c0_31 = arith.constant 0 : index
    %65 = vector.load %arg11[%c64_30, %c0_31] : memref<192x128xf32, #tpu.memory_space<vmem>>, vector<64x128xf32>
    tpu.vector_store %arg11[%c64_30, %c0_31], %57 {strides = array<i32>} : memref<192x128xf32, #tpu.memory_space<vmem>>, vector<64x128xf32>,
    %c128 = arith.constant 128 : index
    %c0_32 = arith.constant 0 : index
    %66 = vector.load %arg11[%c128, %c0_32] : memref<192x128xf32, #tpu.memory_space<vmem>>, vector<64x128xf32>
    tpu.vector_store %arg11[%c128, %c0_32], %63 {strides = array<i32>} : memref<192x128xf32, #tpu.memory_space<vmem>>, vector<64x128xf32>,
    %c0_33 = arith.constant 0 : index
    %c0_34 = arith.constant 0 : index
    %67 = vector.load %arg6[%c0_33, %c0_34] : memref<32x192xf32, #tpu.memory_space<vmem>>, vector<32x192xf32>
    %c0_35 = arith.constant 0 : index
    %c0_36 = arith.constant 0 : index
    %68 = vector.load %arg11[%c0_35, %c0_36] : memref<192x128xf32, #tpu.memory_space<vmem>>, vector<192x128xf32>
    %cst_37 = arith.constant dense<0.000000e+00> : vector<32x128xf32>
    %69 = tpu.matmul %67, %68, %cst_37 {dimension_numbers = #tpu.dot_dimension_numbers<[1], [0], [0], [1], [0, 0, 1, 1], [], []>} : vector<32x192xf32>, vector<192x128xf32>, vector<32x128xf32> -> vector<32x128xf32>
    %c0_38 = arith.constant 0 : index
    %c0_39 = arith.constant 0 : index
    %70 = vector.load %arg7[%c0_38, %c0_39] : memref<32x1xf32, #tpu.memory_space<vmem>>, vector<32x1xf32>
    %71 = vector.broadcast %70 : vector<32x1xf32> to vector<32x128xf32>
    %72 = arith.addf %69, %71 : vector<32x128xf32>
    %cst_40 = arith.constant 0.000000e+00 : f32
    %73 = vector.broadcast %cst_40 : f32 to vector<32x128xf32>
    %74 = arith.maximumf %72, %73 : vector<32x128xf32>
    %c1_i32_41 = arith.constant 1 : i32
    %75 = tpu.dynamic_rotate %74 by %c1_i32_41 dim 1 : vector<32x128xf32>, i32 -> vector<32x128xf32>
    %76 = vector.broadcast %21 : vector<1x128xf32> to vector<32x128xf32>
    %77 = arith.mulf %75, %76 : vector<32x128xf32>
    %c127_i32_42 = arith.constant 127 : i32
    %78 = tpu.dynamic_rotate %74 by %c127_i32_42 dim 1 : vector<32x128xf32>, i32 -> vector<32x128xf32>
    %79 = vector.broadcast %25 : vector<1x128xf32> to vector<32x128xf32>
    %80 = arith.mulf %78, %79 : vector<32x128xf32>
    %c0_43 = arith.constant 0 : index
    %c0_44 = arith.constant 0 : index
    %81 = vector.load %arg11[%c0_43, %c0_44] : memref<192x128xf32, #tpu.memory_space<vmem>>, vector<32x128xf32>
    tpu.vector_store %arg11[%c0_43, %c0_44], %77 {strides = array<i32>} : memref<192x128xf32, #tpu.memory_space<vmem>>, vector<32x128xf32>,
    %c32_45 = arith.constant 32 : index
    %c0_46 = arith.constant 0 : index
    %82 = vector.load %arg11[%c32_45, %c0_46] : memref<192x128xf32, #tpu.memory_space<vmem>>, vector<32x128xf32>
    tpu.vector_store %arg11[%c32_45, %c0_46], %74 {strides = array<i32>} : memref<192x128xf32, #tpu.memory_space<vmem>>, vector<32x128xf32>,
    %c64_47 = arith.constant 64 : index
    %c0_48 = arith.constant 0 : index
    %83 = vector.load %arg11[%c64_47, %c0_48] : memref<192x128xf32, #tpu.memory_space<vmem>>, vector<32x128xf32>
    tpu.vector_store %arg11[%c64_47, %c0_48], %80 {strides = array<i32>} : memref<192x128xf32, #tpu.memory_space<vmem>>, vector<32x128xf32>,
    %c0_49 = arith.constant 0 : index
    %c0_50 = arith.constant 0 : index
    %84 = vector.load %arg8[%c0_49, %c0_50] : memref<1x96xf32, #tpu.memory_space<vmem>>, vector<1x96xf32>
    %c0_51 = arith.constant 0 : index
    %c0_52 = arith.constant 0 : index
    %85 = vector.load %arg11[%c0_51, %c0_52] : memref<192x128xf32, #tpu.memory_space<vmem>>, vector<96x128xf32>
    %cst_53 = arith.constant dense<0.000000e+00> : vector<1x128xf32>
    %86 = tpu.matmul %84, %85, %cst_53 {dimension_numbers = #tpu.dot_dimension_numbers<[1], [0], [0], [1], [0, 0, 1, 1], [], []>} : vector<1x96xf32>, vector<96x128xf32>, vector<1x128xf32> -> vector<1x128xf32>
    %c0_54 = arith.constant 0 : index
    %c0_55 = arith.constant 0 : index
    %87 = vector.load %arg9[%c0_54, %c0_55] : memref<1x1xf32, #tpu.memory_space<vmem>>, vector<1x1xf32>
    %88 = vector.broadcast %87 : vector<1x1xf32> to vector<1x128xf32>
    %89 = arith.addf %86, %88 : vector<1x128xf32>
    %c0_56 = arith.constant 0 : index
    %c0_57 = arith.constant 0 : index
    %c0_58 = arith.constant 0 : index
    %90 = vector.load %arg10[%c0_56, %c0_57, %c0_58] : memref<1x1x128xf32, #tpu.memory_space<vmem>>, vector<1x1x128xf32>
    %91 = vector.shape_cast %90 : vector<1x1x128xf32> to vector<1x128xf32>
    %92 = vector.shape_cast %89 : vector<1x128xf32> to vector<1x1x128xf32>
    tpu.vector_store %arg10[%c0_56, %c0_57, %c0_58], %92 {strides = array<i32>} : memref<1x1x128xf32, #tpu.memory_space<vmem>>, vector<1x1x128xf32>,
    return
  }
  func.func @transform_0(%arg0: i32) -> (i32, i32) {
    %c0_i32 = arith.constant 0 : i32
    %c0_i32_0 = arith.constant 0 : i32
    return %c0_i32, %arg0 : i32, i32
  }
  func.func @transform_1(%arg0: i32) -> (i32, i32) {
    %c0_i32 = arith.constant 0 : i32
    %c0_i32_0 = arith.constant 0 : i32
    %c0_i32_1 = arith.constant 0 : i32
    return %c0_i32, %c0_i32_0 : i32, i32
  }
  func.func @transform_2(%arg0: i32) -> (i32, i32) {
    %c0_i32 = arith.constant 0 : i32
    %c0_i32_0 = arith.constant 0 : i32
    %c0_i32_1 = arith.constant 0 : i32
    return %c0_i32, %c0_i32_0 : i32, i32
  }
  func.func @transform_3(%arg0: i32) -> (i32, i32) {
    %c0_i32 = arith.constant 0 : i32
    %c0_i32_0 = arith.constant 0 : i32
    %c0_i32_1 = arith.constant 0 : i32
    return %c0_i32, %c0_i32_0 : i32, i32
  }
  func.func @transform_4(%arg0: i32) -> (i32, i32) {
    %c0_i32 = arith.constant 0 : i32
    %c0_i32_0 = arith.constant 0 : i32
    %c0_i32_1 = arith.constant 0 : i32
    return %c0_i32, %c0_i32_0 : i32, i32
  }
  func.func @transform_5(%arg0: i32) -> (i32, i32) {
    %c0_i32 = arith.constant 0 : i32
    %c0_i32_0 = arith.constant 0 : i32
    %c0_i32_1 = arith.constant 0 : i32
    return %c0_i32, %c0_i32_0 : i32, i32
  }
  func.func @transform_6(%arg0: i32) -> (i32, i32) {
    %c0_i32 = arith.constant 0 : i32
    %c0_i32_0 = arith.constant 0 : i32
    %c0_i32_1 = arith.constant 0 : i32
    return %c0_i32, %c0_i32_0 : i32, i32
  }
  func.func @transform_7(%arg0: i32) -> (i32, i32) {
    %c0_i32 = arith.constant 0 : i32
    %c0_i32_0 = arith.constant 0 : i32
    %c0_i32_1 = arith.constant 0 : i32
    return %c0_i32, %c0_i32_0 : i32, i32
  }
  func.func @transform_8(%arg0: i32) -> (i32, i32) {
    %c0_i32 = arith.constant 0 : i32
    %c0_i32_0 = arith.constant 0 : i32
    %c0_i32_1 = arith.constant 0 : i32
    return %c0_i32, %c0_i32_0 : i32, i32
  }
  func.func @transform_9(%arg0: i32) -> (i32, i32, i32) {
    %c0_i32 = arith.constant 0 : i32
    %c0_i32_0 = arith.constant 0 : i32
    %c0_i32_1 = arith.constant 0 : i32
    return %arg0, %c0_i32, %c0_i32_0 : i32, i32, i32
  }
}

</mosaic_0001>

<llo_original>
// kernel: tpu_custom_call.1
$region0: #{tpu_custom_call.1}
  #allocation0 [shape = 'u32[]', space=smem, size = 0x4, offset = 0x4, fixed_abs, tag = 'smem constant byte address 0x4 - core index']
  #allocation1 [shape = 'u32[144,128]{1,0:T(1,128)}', space=vmem, size = 0x12000, scoped, tag = 'internal scratch']
  #allocation2 [shape = 'f32[192,128]{1,0:T(8,128)}', space=vmem, size = 0x18000, scoped, tag = 'scratch operand']
  #allocation3 [shape = 'f32[1,1]{1,0:T(1,128)S(1)}', space=vmem, size = 0x200, scoped, tag = 'scoped memory for tpu_custom_call.1']
  %s0 = inlined_call_operand.vmem [shape: f32[2,128], index: 0, kind: input, shape index: {}]
  %s1 = inlined_call_operand.vmem [shape: f32[32,8], index: 1, kind: input, shape index: {}]
  %s2 = inlined_call_operand.vmem [shape: f32[32,1], index: 2, kind: input, shape index: {}]
  %s3 = inlined_call_operand.vmem [shape: f32[64,96], index: 3, kind: input, shape index: {}]
  %s4 = inlined_call_operand.vmem [shape: f32[64,1], index: 4, kind: input, shape index: {}]
  %s5 = inlined_call_operand.vmem [shape: f32[32,192], index: 5, kind: input, shape index: {}]
  %s6 = inlined_call_operand.vmem [shape: f32[32,1], index: 6, kind: input, shape index: {}]
  %s7 = inlined_call_operand.vmem [shape: f32[1,96], index: 7, kind: input, shape index: {}]
  %s8 = inlined_call_operand.<no memory space> [shape: f32[1,1], index: 8, kind: input, shape index: {}]
  %s9 = inlined_call_operand.hbm [shape: f32[1,1,128], index: 9, kind: output, shape index: {}]
  %s10 = sld [smem:[#allocation0]]
  $region46: #{tpu_custom_call.1} parent=0
    _
  %s12 = ssub.s32 1, %s10
  %s13 = scalar_select 0, %s12, %s10
  %v14 = vstv %s8
  %15 = vst [vmem:[#allocation3] sm:$0x1] %v14
  $region1: #{tpu_custom_call.1} parent=0
    #allocation4 [shape = 'u8[512]{0}', space=vmem, size = 0x400, scoped, tag = 'output window, operand 0, single buffered']
    #allocation5 [shape = 's32[1]{0}', space=sflag, size = 0x4, scoped, tag = 'scoped memory for tpu_custom_call.1']
    %16 = vsyncpa [#allocation5], 0
    // Predicated region
    $region2: #{tpu_custom_call.1} parent=1 // pred_check
      _
    $region3: #{tpu_custom_call.1} parent=1 // pred_check_branch
      %18 = sbr.rel (0) target = $region5
    $region4: #{tpu_custom_call.1} parent=1 // pred_region
      _
    $region5: #{tpu_custom_call.1} parent=1 // pred_fallthru
      _
    // Predicated region
    $region6: #{tpu_custom_call.1} parent=1 // pred_check
      _
    $region7: #{tpu_custom_call.1} parent=1 // pred_check_branch
      %20 = sbr.rel (0) target = $region9
    $region8: #{tpu_custom_call.1} parent=1 // pred_region
      _
    $region9: #{tpu_custom_call.1} parent=1 // pred_fallthru
      _
    // Predicated region
    $region10: #{tpu_custom_call.1} parent=1 // pred_check
      _
    $region11: #{tpu_custom_call.1} parent=1 // pred_check_branch
      %22 = sbr.rel (0) target = $region13
    $region12: #{tpu_custom_call.1} parent=1 // pred_region
      _
    $region13: #{tpu_custom_call.1} parent=1 // pred_fallthru
      _
    // Predicated region
    $region14: #{tpu_custom_call.1} parent=1 // pred_check
      _
    $region15: #{tpu_custom_call.1} parent=1 // pred_check_branch
      %24 = sbr.rel (0) target = $region17
    $region16: #{tpu_custom_call.1} parent=1 // pred_region
      _
    $region17: #{tpu_custom_call.1} parent=1 // pred_fallthru
      _
    // Predicated region
    $region18: #{tpu_custom_call.1} parent=1 // pred_check
      _
    $region19: #{tpu_custom_call.1} parent=1 // pred_check_branch
      %26 = sbr.rel (0) target = $region21
    $region20: #{tpu_custom_call.1} parent=1 // pred_region
      _
    $region21: #{tpu_custom_call.1} parent=1 // pred_fallthru
      _
    // Predicated region
    $region22: #{tpu_custom_call.1} parent=1 // pred_check
      _
    $region23: #{tpu_custom_call.1} parent=1 // pred_check_branch
      %28 = sbr.rel (0) target = $region25
    $region24: #{tpu_custom_call.1} parent=1 // pred_region
      _
    $region25: #{tpu_custom_call.1} parent=1 // pred_fallthru
      _
    // Predicated region
    $region26: #{tpu_custom_call.1} parent=1 // pred_check
      _
    $region27: #{tpu_custom_call.1} parent=1 // pred_check_branch
      %30 = sbr.rel (0) target = $region29
    $region28: #{tpu_custom_call.1} parent=1 // pred_region
      _
    $region29: #{tpu_custom_call.1} parent=1 // pred_fallthru
      _
    // Predicated region
    $region30: #{tpu_custom_call.1} parent=1 // pred_check
      _
    $region31: #{tpu_custom_call.1} parent=1 // pred_check_branch
      %32 = sbr.rel (0) target = $region33
    $region32: #{tpu_custom_call.1} parent=1 // pred_region
      _
    $region33: #{tpu_custom_call.1} parent=1 // pred_fallthru
      _
    // Predicated region
    $region34: #{tpu_custom_call.1} parent=1 // pred_check
      _
    $region35: #{tpu_custom_call.1} parent=1 // pred_check_branch
      %34 = sbr.rel (0) target = $region37
    $region36: #{tpu_custom_call.1} parent=1 // pred_region
      _
    $region37: #{tpu_custom_call.1} parent=1 // pred_fallthru
      _
    %v35 = vld [vmem:[%s0] sm:$0x3]
    %v36 = vlaneseq
    %v37 = vand.u32 %v36, 127
    %vm38 = vcmp.lt.s32.totalorder %v37, 0
    %v39 = vsub.s32 0, %v37
    %v40 = vsel %vm38, %v39, %v37
    %v41 = vshrl.u32 %v40, 4
    %v42 = vand.u32 %v40, 15
    %v43 = vsub.s32 0, %v42
    %v44 = vsel %vm38, %v43, %v42
    %vm45 = vcmp.ne.s32.totalorder %v44, 0
    %vm46 = vcmp.lt.s32.totalorder %v44, 0
    %vm47 = vmand %vm46, %vm45
    %v48 = vadd.s32 %v44, 16
    %v49 = vsel %vm47, %v48, %v44
    %vm50 = vcmp.ne.s32.totalorder %v49, 0
    %v51 = vsel %vm50, 1, 0
    %v52 = vcvt.s32.f32 %v51
    %vm53 = vcmp.ne.s32.totalorder %v49, 15
    %v54 = vsel %vm53, 1, 0
    %v55 = vcvt.s32.f32 %v54
    %56 = vrot.lane.b32.xlu0 %v35, 1
    %v57 = vpop.permute.xlu0 %56
    %v58 = vmul.f32 %v57, %v52
    %59 = vrot.lane.b32.xlu0 %v35, 127
    %v60 = vpop.permute.xlu0 %59
    %v61 = vmul.f32 %v60, %v55
    %v63 = vrot.slane %v35, 6
    %v66 = vrot.slane %v61, 4
    %vm68 = vcmask 1041408
    %v69 = vsel %vm68, %v58, %v63
    %vm70 = vcmask 1043456
    %v71 = vsel %vm70, %v69, %v66
    %vm72 = vcmask 1045504
    %v73 = vsel %vm72, %v71, 0.0
    %v74 = vld [vmem:[%s1] sm:$0xff]
    %v75 = vld [vmem:[%s1 + $0x8] sm:$0xff]
    %v76 = vld [vmem:[%s1 + $0x10] sm:$0xff]
    %v77 = vld [vmem:[%s1 + $0x18] sm:$0xff]
    %v78 = vld [vmem:[%s2] sm:$0xff]
    %v79 = vld [vmem:[%s2 + $0x8] sm:$0xff]
    %v80 = vld [vmem:[%s2 + $0x10] sm:$0xff]
    %v81 = vld [vmem:[%s2 + $0x18] sm:$0xff]
    %83 = vset.pattern.permute.xlu0 0
    %84 = vperm.xlu0 %83, %v78
    %v85 = vpop.permute.xlu0 %84
    %88 = vset.pattern.permute.xlu0 0
    %89 = vperm.xlu0 %88, %v79
    %v90 = vpop.permute.xlu0 %89
    %93 = vset.pattern.permute.xlu0 0
    %94 = vperm.xlu0 %93, %v80
    %v95 = vpop.permute.xlu0 %94
    %98 = vset.pattern.permute.xlu0 0
    %99 = vperm.xlu0 %98, %v81
    %v100 = vpop.permute.xlu0 %99
    %vm102 = vcmask 64512
    %v104 = vsel %vm102, %v74, 0
    %v107 = vsel %vm102, %v75, 0
    %v110 = vsel %vm102, %v76, 0
    %v113 = vsel %vm102, %v77, 0
    %115 = vmatprep.subr.mxu0 0.0
    %116 = vmatpush1.msra.mxu0 %v73
    %117 = vmatprep.subr.mxu0 0.0
    %118 = vmatpush1.msra.mxu0 0.0
    %119 = vmatprep.subr.mxu0 0.0
    %120 = vmatpush1.msra.mxu0 0.0
    %121 = vmatprep.subr.mxu0 0.0
    %122 = vmatpush1.msra.mxu0 0.0
    %123 = vmatprep.subr.mxu0 0.0
    %124 = vmatpush1.msra.mxu0 0.0
    %125 = vmatprep.subr.mxu0 0.0
    %126 = vmatpush1.msra.mxu0 0.0
    %127 = vmatprep.subr.mxu0 0.0
    %128 = vmatpush1.msra.mxu0 0.0
    %129 = vmatprep.subr.mxu0 0.0
    %130 = vmatpush1.msra.mxu0 0.0
    %131 = vmatprep.subr.mxu0 0.0
    %132 = vmatpush1.msra.mxu0 0.0
    %133 = vmatprep.subr.mxu0 0.0
    %134 = vmatpush1.msra.mxu0 0.0
    %135 = vmatprep.subr.mxu0 0.0
    %136 = vmatpush1.msra.mxu0 0.0
    %137 = vmatprep.subr.mxu0 0.0
    %138 = vmatpush1.msra.mxu0 0.0
    %139 = vmatprep.subr.mxu0 0.0
    %140 = vmatpush1.msra.mxu0 0.0
    %141 = vmatprep.subr.mxu0 0.0
    %142 = vmatpush1.msra.mxu0 0.0
    %143 = vmatprep.subr.mxu0 0.0
    %144 = vmatpush1.msra.mxu0 0.0
    %145 = vmatprep.subr.mxu0 0.0
    %146 = vmatpush1.msra.mxu0 0.0
    %147 = vmatprep.subr.mxu0 0.0
    %148 = vmatpush1.msra.mxu0 0.0
    %149 = vmatprep.subr.mxu0 0.0
    %150 = vmatpush1.msra.mxu0 0.0
    %151 = vmatprep.subr.mxu0 0.0
    %152 = vmatpush1.msra.mxu0 0.0
    %153 = vmatprep.subr.mxu0 0.0
    %154 = vmatpush1.msra.mxu0 0.0
    %155 = vmatprep.subr.mxu0 0.0
    %156 = vmatpush1.msra.mxu0 0.0
    %157 = vmatprep.subr.mxu0 0.0
    %158 = vmatpush1.msra.mxu0 0.0
    %159 = vmatprep.subr.mxu0 0.0
    %160 = vmatpush1.msra.mxu0 0.0
    %161 = vmatprep.subr.mxu0 0.0
    %162 = vmatpush1.msra.mxu0 0.0
    %163 = vmatprep.subr.mxu0 0.0
    %164 = vmatpush1.msra.mxu0 0.0
    %165 = vmatprep.subr.mxu0 0.0
    %166 = vmatpush1.msra.mxu0 0.0
    %167 = vmatprep.subr.mxu0 0.0
    %168 = vmatpush1.msra.mxu0 0.0
    %169 = vmatprep.subr.mxu0 0.0
    %170 = vmatpush1.msra.mxu0 0.0
    %171 = vmatprep.subr.mxu0 0.0
    %172 = vmatpush1.msra.mxu0 0.0
    %173 = vmatprep.subr.mxu0 0.0
    %174 = vmatpush1.msra.mxu0 0.0
    %175 = vmatprep.subr.mxu0 0.0
    %176 = vmatpush1.msra.mxu0 0.0
    %177 = vmatprep.subr.mxu0 0.0
    %178 = vmatpush1.msra.mxu0 0.0
    %179 = vmatprep.mubr.f32.mxu0 0.0
    %180 = vmatmul.mubr.f32.gmra.mrb[0].mxu0 %v104
    %v181 = vpop.f32.mrb[0].mxu0
    %v182 = vadd.f32 %v85, %v181
    %v183 = vpop.f32.mrb[0].mxu0
    %184 = vmatprep.mubr.f32.mxu0 0.0
    %185 = vmatmul.mubr.f32.gmra.mrb[0].mxu0 %v107
    %v186 = vpop.f32.mrb[0].mxu0
    %v187 = vadd.f32 %v90, %v186
    %v188 = vpop.f32.mrb[0].mxu0
    %189 = vmatprep.mubr.f32.mxu0 0.0
    %190 = vmatmul.mubr.f32.gmra.mrb[0].mxu0 %v110
    %v191 = vpop.f32.mrb[0].mxu0
    %v192 = vadd.f32 %v95, %v191
    %v193 = vpop.f32.mrb[0].mxu0
    %194 = vmatprep.mubr.f32.mxu0 0.0
    %195 = vmatmul.mubr.f32.gmra.mrb[0].mxu0 %v113
    %v196 = vpop.f32.mrb[0].mxu0
    %v197 = vadd.f32 %v100, %v196
    %v198 = vpop.f32.mrb[0].mxu0
    %199 = vdwg.mxu0
    %v200 = vmax.f32 %v182, 0.0
    %v201 = vmax.f32 %v187, 0.0
    %v202 = vmax.f32 %v192, 0.0
    %v203 = vmax.f32 %v197, 0.0
    %204 = vrot.lane.b32.xlu0 %v200, 1
    %v205 = vpop.permute.xlu0 %204
    %206 = vrot.lane.b32.xlu0 %v201, 1
    %v207 = vpop.permute.xlu0 %206
    %208 = vrot.lane.b32.xlu0 %v202, 1
    %v209 = vpop.permute.xlu0 %208
    %210 = vrot.lane.b32.xlu0 %v203, 1
    %v211 = vpop.permute.xlu0 %210
    %v212 = vmul.f32 %v205, %v52
    %v213 = vmul.f32 %v207, %v52
    %v214 = vmul.f32 %v209, %v52
    %v215 = vmul.f32 %v211, %v52
    %216 = vrot.lane.b32.xlu0 %v200, 127
    %v217 = vpop.permute.xlu0 %216
    %218 = vrot.lane.b32.xlu0 %v201, 127
    %v219 = vpop.permute.xlu0 %218
    %220 = vrot.lane.b32.xlu0 %v202, 127
    %v221 = vpop.permute.xlu0 %220
    %222 = vrot.lane.b32.xlu0 %v203, 127
    %v223 = vpop.permute.xlu0 %222
    %v224 = vmul.f32 %v217, %v55
    %v225 = vmul.f32 %v219, %v55
    %v226 = vmul.f32 %v221, %v55
    %v227 = vmul.f32 %v223, %v55
    %228 = vst [vmem:[#allocation2] sm:$0xff] %v212
    %229 = vst [vmem:[#allocation2 + $0x8] sm:$0xff] %v213
    %230 = vst [vmem:[#allocation2 + $0x10] sm:$0xff] %v214
    %231 = vst [vmem:[#allocation2 + $0x18] sm:$0xff] %v215
    %232 = vst [vmem:[#allocation2 + $0x20] sm:$0xff] %v200
    %233 = vst [vmem:[#allocation2 + $0x28] sm:$0xff] %v201
    %234 = vst [vmem:[#allocation2 + $0x30] sm:$0xff] %v202
    %235 = vst [vmem:[#allocation2 + $0x38] sm:$0xff] %v203
    %236 = vst [vmem:[#allocation2 + $0x40] sm:$0xff] %v224
    %237 = vst [vmem:[#allocation2 + $0x48] sm:$0xff] %v225
    %238 = vst [vmem:[#allocation2 + $0x50] sm:$0xff] %v226
    %239 = vst [vmem:[#allocation2 + $0x58] sm:$0xff] %v227
    %v240 = vld [vmem:[%s3] sm:$0xff]
    %v241 = vld [vmem:[%s3 + $0x8] sm:$0xff]
    %v242 = vld [vmem:[%s3 + $0x10] sm:$0xff]
    %v243 = vld [vmem:[%s3 + $0x18] sm:$0xff]
    %v244 = vld [vmem:[%s3 + $0x20] sm:$0xff]
    %v245 = vld [vmem:[%s3 + $0x28] sm:$0xff]
    %v246 = vld [vmem:[%s3 + $0x30] sm:$0xff]
    %v247 = vld [vmem:[%s3 + $0x38] sm:$0xff]
    %v248 = vld [vmem:[#allocation2] sm:$0xff]
    %v249 = vld [vmem:[#allocation2 + $0x8] sm:$0xff]
    %v250 = vld [vmem:[#allocation2 + $0x10] sm:$0xff]
    %v251 = vld [vmem:[#allocation2 + $0x18] sm:$0xff]
    %v252 = vld [vmem:[#allocation2 + $0x20] sm:$0xff]
    %v253 = vld [vmem:[#allocation2 + $0x28] sm:$0xff]
    %v254 = vld [vmem:[#allocation2 + $0x30] sm:$0xff]
    %v255 = vld [vmem:[#allocation2 + $0x38] sm:$0xff]
    %v256 = vld [vmem:[#allocation2 + $0x40] sm:$0xff]
    %v257 = vld [vmem:[#allocation2 + $0x48] sm:$0xff]
    %v258 = vld [vmem:[#allocation2 + $0x50] sm:$0xff]
    %v259 = vld [vmem:[#allocation2 + $0x58] sm:$0xff]
    %v260 = vld [vmem:[%s4] sm:$0xff]
    %v261 = vld [vmem:[%s4 + $0x8] sm:$0xff]
    %v262 = vld [vmem:[%s4 + $0x10] sm:$0xff]
    %v263 = vld [vmem:[%s4 + $0x18] sm:$0xff]
    %v264 = vld [vmem:[%s4 + $0x20] sm:$0xff]
    %v265 = vld [vmem:[%s4 + $0x28] sm:$0xff]
    %v266 = vld [vmem:[%s4 + $0x30] sm:$0xff]
    %v267 = vld [vmem:[%s4 + $0x38] sm:$0xff]
    %269 = vset.pattern.permute.xlu0 0
    %270 = vperm.xlu0 %269, %v260
    %v271 = vpop.permute.xlu0 %270
    %274 = vset.pattern.permute.xlu0 0
    %275 = vperm.xlu0 %274, %v261
    %v276 = vpop.permute.xlu0 %275
    %279 = vset.pattern.permute.xlu0 0
    %280 = vperm.xlu0 %279, %v262
    %v281 = vpop.permute.xlu0 %280
    %284 = vset.pattern.permute.xlu0 0
    %285 = vperm.xlu0 %284, %v263
    %v286 = vpop.permute.xlu0 %285
    %289 = vset.pattern.permute.xlu0 0
    %290 = vperm.xlu0 %289, %v264
    %v291 = vpop.permute.xlu0 %290
    %294 = vset.pattern.permute.xlu0 0
    %295 = vperm.xlu0 %294, %v265
    %v296 = vpop.permute.xlu0 %295
    %299 = vset.pattern.permute.xlu0 0
    %300 = vperm.xlu0 %299, %v266
    %v301 = vpop.permute.xlu0 %300
    %304 = vset.pattern.permute.xlu0 0
    %305 = vperm.xlu0 %304, %v267
    %v306 = vpop.permute.xlu0 %305
    %vm308 = vcmask 785408
    %v310 = vsel %vm308, %v240, 0
    %v313 = vsel %vm308, %v241, 0
    %v316 = vsel %vm308, %v242, 0
    %v319 = vsel %vm308, %v243, 0
    %v322 = vsel %vm308, %v244, 0
    %v325 = vsel %vm308, %v245, 0
    %v328 = vsel %vm308, %v246, 0
    %v331 = vsel %vm308, %v247, 0
    %333 = vmatprep.subr.mxu0 0.0
    %334 = vmatpush1.msra.mxu0 %v248
    %335 = vmatprep.subr.mxu0 0.0
    %336 = vmatpush1.msra.mxu0 %v249
    %337 = vmatprep.subr.mxu0 0.0
    %338 = vmatpush1.msra.mxu0 %v250
    %339 = vmatprep.subr.mxu0 0.0
    %340 = vmatpush1.msra.mxu0 %v251
    %341 = vmatprep.subr.mxu0 0.0
    %342 = vmatpush1.msra.mxu0 %v252
    %343 = vmatprep.subr.mxu0 0.0
    %344 = vmatpush1.msra.mxu0 %v253
    %345 = vmatprep.subr.mxu0 0.0
    %346 = vmatpush1.msra.mxu0 %v254
    %347 = vmatprep.subr.mxu0 0.0
    %348 = vmatpush1.msra.mxu0 %v255
    %349 = vmatprep.subr.mxu0 0.0
    %350 = vmatpush1.msra.mxu0 %v256
    %351 = vmatprep.subr.mxu0 0.0
    %352 = vmatpush1.msra.mxu0 %v257
    %353 = vmatprep.subr.mxu0 0.0
    %354 = vmatpush1.msra.mxu0 %v258
    %355 = vmatprep.subr.mxu0 0.0
    %356 = vmatpush1.msra.mxu0 %v259
    %357 = vmatprep.subr.mxu0 0.0
    %358 = vmatpush1.msra.mxu0 0.0
    %359 = vmatprep.subr.mxu0 0.0
    %360 = vmatpush1.msra.mxu0 0.0
    %361 = vmatprep.subr.mxu0 0.0
    %362 = vmatpush1.msra.mxu0 0.0
    %363 = vmatprep.subr.mxu0 0.0
    %364 = vmatpush1.msra.mxu0 0.0
    %365 = vmatprep.subr.mxu0 0.0
    %366 = vmatpush1.msra.mxu0 0.0
    %367 = vmatprep.subr.mxu0 0.0
    %368 = vmatpush1.msra.mxu0 0.0
    %369 = vmatprep.subr.mxu0 0.0
    %370 = vmatpush1.msra.mxu0 0.0
    %371 = vmatprep.subr.mxu0 0.0
    %372 = vmatpush1.msra.mxu0 0.0
    %373 = vmatprep.subr.mxu0 0.0
    %374 = vmatpush1.msra.mxu0 0.0
    %375 = vmatprep.subr.mxu0 0.0
    %376 = vmatpush1.msra.mxu0 0.0
    %377 = vmatprep.subr.mxu0 0.0
    %378 = vmatpush1.msra.mxu0 0.0
    %379 = vmatprep.subr.mxu0 0.0
    %380 = vmatpush1.msra.mxu0 0.0
    %381 = vmatprep.subr.mxu0 0.0
    %382 = vmatpush1.msra.mxu0 0.0
    %383 = vmatprep.subr.mxu0 0.0
    %384 = vmatpush1.msra.mxu0 0.0
    %385 = vmatprep.subr.mxu0 0.0
    %386 = vmatpush1.msra.mxu0 0.0
    %387 = vmatprep.subr.mxu0 0.0
    %388 = vmatpush1.msra.mxu0 0.0
    %389 = vmatprep.subr.mxu0 0.0
    %390 = vmatpush1.msra.mxu0 0.0
    %391 = vmatprep.subr.mxu0 0.0
    %392 = vmatpush1.msra.mxu0 0.0
    %393 = vmatprep.subr.mxu0 0.0
    %394 = vmatpush1.msra.mxu0 0.0
    %395 = vmatprep.subr.mxu0 0.0
    %396 = vmatpush1.msra.mxu0 0.0
    %397 = vmatprep.mubr.f32.mxu0 0.0
    %398 = vmatmul.mubr.f32.gmra.mrb[0].mxu0 %v310
    %v399 = vpop.f32.mrb[0].mxu0
    %v400 = vadd.f32 %v271, %v399
    %v401 = vpop.f32.mrb[0].mxu0
    %402 = vmatprep.mubr.f32.mxu0 0.0
    %403 = vmatmul.mubr.f32.gmra.mrb[0].mxu0 %v313
    %v404 = vpop.f32.mrb[0].mxu0
    %v405 = vadd.f32 %v276, %v404
    %v406 = vpop.f32.mrb[0].mxu0
    %407 = vmatprep.mubr.f32.mxu0 0.0
    %408 = vmatmul.mubr.f32.gmra.mrb[0].mxu0 %v316
    %v409 = vpop.f32.mrb[0].mxu0
    %v410 = vadd.f32 %v281, %v409
    %v411 = vpop.f32.mrb[0].mxu0
    %412 = vmatprep.mubr.f32.mxu0 0.0
    %413 = vmatmul.mubr.f32.gmra.mrb[0].mxu0 %v319
    %v414 = vpop.f32.mrb[0].mxu0
    %v415 = vadd.f32 %v286, %v414
    %v416 = vpop.f32.mrb[0].mxu0
    %417 = vmatprep.mubr.f32.mxu0 0.0
    %418 = vmatmul.mubr.f32.gmra.mrb[0].mxu0 %v322
    %v419 = vpop.f32.mrb[0].mxu0
    %v420 = vadd.f32 %v291, %v419
    %v421 = vpop.f32.mrb[0].mxu0
    %422 = vmatprep.mubr.f32.mxu0 0.0
    %423 = vmatmul.mubr.f32.gmra.mrb[0].mxu0 %v325
    %v424 = vpop.f32.mrb[0].mxu0
    %v425 = vadd.f32 %v296, %v424
    %v426 = vpop.f32.mrb[0].mxu0
    %427 = vmatprep.mubr.f32.mxu0 0.0
    %428 = vmatmul.mubr.f32.gmra.mrb[0].mxu0 %v328
    %v429 = vpop.f32.mrb[0].mxu0
    %v430 = vadd.f32 %v301, %v429
    %v431 = vpop.f32.mrb[0].mxu0
    %432 = vmatprep.mubr.f32.mxu0 0.0
    %433 = vmatmul.mubr.f32.gmra.mrb[0].mxu0 %v331
    %v434 = vpop.f32.mrb[0].mxu0
    %v435 = vadd.f32 %v306, %v434
    %v436 = vpop.f32.mrb[0].mxu0
    %437 = vdwg.mxu0
    %v438 = vmax.f32 %v400, 0.0
    %v439 = vmax.f32 %v405, 0.0
    %v440 = vmax.f32 %v410, 0.0
    %v441 = vmax.f32 %v415, 0.0
    %v442 = vmax.f32 %v420, 0.0
    %v443 = vmax.f32 %v425, 0.0
    %v444 = vmax.f32 %v430, 0.0
    %v445 = vmax.f32 %v435, 0.0
    %446 = vrot.lane.b32.xlu0 %v438, 1
    %v447 = vpop.permute.xlu0 %446
    %448 = vrot.lane.b32.xlu0 %v439, 1
    %v449 = vpop.permute.xlu0 %448
    %450 = vrot.lane.b32.xlu0 %v440, 1
    %v451 = vpop.permute.xlu0 %450
    %452 = vrot.lane.b32.xlu0 %v441, 1
    %v453 = vpop.permute.xlu0 %452
    %454 = vrot.lane.b32.xlu0 %v442, 1
    %v455 = vpop.permute.xlu0 %454
    %456 = vrot.lane.b32.xlu0 %v443, 1
    %v457 = vpop.permute.xlu0 %456
    %458 = vrot.lane.b32.xlu0 %v444, 1
    %v459 = vpop.permute.xlu0 %458
    %460 = vrot.lane.b32.xlu0 %v445, 1
    %v461 = vpop.permute.xlu0 %460
    %v462 = vmul.f32 %v447, %v52
    %v463 = vmul.f32 %v449, %v52
    %v464 = vmul.f32 %v451, %v52
    %v465 = vmul.f32 %v453, %v52
    %v466 = vmul.f32 %v455, %v52
    %v467 = vmul.f32 %v457, %v52
    %v468 = vmul.f32 %v459, %v52
    %v469 = vmul.f32 %v461, %v52
    %470 = vrot.lane.b32.xlu0 %v438, 127
    %v471 = vpop.permute.xlu0 %470
    %472 = vrot.lane.b32.xlu0 %v439, 127
    %v473 = vpop.permute.xlu0 %472
    %474 = vrot.lane.b32.xlu0 %v440, 127
    %v475 = vpop.permute.xlu0 %474
    %476 = vrot.lane.b32.xlu0 %v441, 127
    %v477 = vpop.permute.xlu0 %476
    %478 = vrot.lane.b32.xlu0 %v442, 127
    %v479 = vpop.permute.xlu0 %478
    %480 = vrot.lane.b32.xlu0 %v443, 127
    %v481 = vpop.permute.xlu0 %480
    %482 = vrot.lane.b32.xlu0 %v444, 127
    %v483 = vpop.permute.xlu0 %482
    %484 = vrot.lane.b32.xlu0 %v445, 127
    %v485 = vpop.permute.xlu0 %484
    %v486 = vmul.f32 %v471, %v55
    %v487 = vmul.f32 %v473, %v55
    %v488 = vmul.f32 %v475, %v55
    %v489 = vmul.f32 %v477, %v55
    %v490 = vmul.f32 %v479, %v55
    %v491 = vmul.f32 %v481, %v55
    %v492 = vmul.f32 %v483, %v55
    %v493 = vmul.f32 %v485, %v55
    %494 = vst [vmem:[#allocation2] sm:$0xff] %v462
    %495 = vst [vmem:[#allocation2 + $0x8] sm:$0xff] %v463
    %496 = vst [vmem:[#allocation2 + $0x10] sm:$0xff] %v464
    %497 = vst [vmem:[#allocation2 + $0x18] sm:$0xff] %v465
    %498 = vst [vmem:[#allocation2 + $0x20] sm:$0xff] %v466
    %499 = vst [vmem:[#allocation2 + $0x28] sm:$0xff] %v467
    %500 = vst [vmem:[#allocation2 + $0x30] sm:$0xff] %v468
    %501 = vst [vmem:[#allocation2 + $0x38] sm:$0xff] %v469
    %502 = vst [vmem:[#allocation2 + $0x40] sm:$0xff] %v438
    %503 = vst [vmem:[#allocation2 + $0x48] sm:$0xff] %v439
    %504 = vst [vmem:[#allocation2 + $0x50] sm:$0xff] %v440
    %505 = vst [vmem:[#allocation2 + $0x58] sm:$0xff] %v441
    %506 = vst [vmem:[#allocation2 + $0x60] sm:$0xff] %v442
    %507 = vst [vmem:[#allocation2 + $0x68] sm:$0xff] %v443
    %508 = vst [vmem:[#allocation2 + $0x70] sm:$0xff] %v444
    %509 = vst [vmem:[#allocation2 + $0x78] sm:$0xff] %v445
    %510 = vst [vmem:[#allocation2 + $0x80] sm:$0xff] %v486
    %511 = vst [vmem:[#allocation2 + $0x88] sm:$0xff] %v487
    %512 = vst [vmem:[#allocation2 + $0x90] sm:$0xff] %v488
    %513 = vst [vmem:[#allocation2 + $0x98] sm:$0xff] %v489
    %514 = vst [vmem:[#allocation2 + $0xa0] sm:$0xff] %v490
    %515 = vst [vmem:[#allocation2 + $0xa8] sm:$0xff] %v491
    %516 = vst [vmem:[#allocation2 + $0xb0] sm:$0xff] %v492
    %517 = vst [vmem:[#allocation2 + $0xb8] sm:$0xff] %v493
    %v518 = vld [vmem:[%s5] sm:$0xff]
    %v519 = vld [vmem:[%s5 + $0x8] sm:$0xff]
    %v520 = vld [vmem:[%s5 + $0x10] sm:$0xff]
    %v521 = vld [vmem:[%s5 + $0x18] sm:$0xff]
    %v522 = vld [vmem:[%s5 + $0x20] sm:$0xff]
    %v523 = vld [vmem:[%s5 + $0x28] sm:$0xff]
    %v524 = vld [vmem:[%s5 + $0x30] sm:$0xff]
    %v525 = vld [vmem:[%s5 + $0x38] sm:$0xff]
    %v526 = vld [vmem:[#allocation2] sm:$0xff]
    %v527 = vld [vmem:[#allocation2 + $0x8] sm:$0xff]
    %v528 = vld [vmem:[#allocation2 + $0x10] sm:$0xff]
    %v529 = vld [vmem:[#allocation2 + $0x18] sm:$0xff]
    %v530 = vld [vmem:[#allocation2 + $0x20] sm:$0xff]
    %v531 = vld [vmem:[#allocation2 + $0x28] sm:$0xff]
    %v532 = vld [vmem:[#allocation2 + $0x30] sm:$0xff]
    %v533 = vld [vmem:[#allocation2 + $0x38] sm:$0xff]
    %v534 = vld [vmem:[#allocation2 + $0x40] sm:$0xff]
    %v535 = vld [vmem:[#allocation2 + $0x48] sm:$0xff]
    %v536 = vld [vmem:[#allocation2 + $0x50] sm:$0xff]
    %v537 = vld [vmem:[#allocation2 + $0x58] sm:$0xff]
    %v538 = vld [vmem:[#allocation2 + $0x60] sm:$0xff]
    %v539 = vld [vmem:[#allocation2 + $0x68] sm:$0xff]
    %v540 = vld [vmem:[#allocation2 + $0x70] sm:$0xff]
    %v541 = vld [vmem:[#allocation2 + $0x78] sm:$0xff]
    %v542 = vld [vmem:[#allocation2 + $0x80] sm:$0xff]
    %v543 = vld [vmem:[#allocation2 + $0x88] sm:$0xff]
    %v544 = vld [vmem:[#allocation2 + $0x90] sm:$0xff]
    %v545 = vld [vmem:[#allocation2 + $0x98] sm:$0xff]
    %v546 = vld [vmem:[#allocation2 + $0xa0] sm:$0xff]
    %v547 = vld [vmem:[#allocation2 + $0xa8] sm:$0xff]
    %v548 = vld [vmem:[#allocation2 + $0xb0] sm:$0xff]
    %v549 = vld [vmem:[#allocation2 + $0xb8] sm:$0xff]
    %v550 = vld [vmem:[%s6] sm:$0xff]
    %v551 = vld [vmem:[%s6 + $0x8] sm:$0xff]
    %v552 = vld [vmem:[%s6 + $0x10] sm:$0xff]
    %v553 = vld [vmem:[%s6 + $0x18] sm:$0xff]
    %555 = vset.pattern.permute.xlu0 0
    %556 = vperm.xlu0 %555, %v550
    %v557 = vpop.permute.xlu0 %556
    %560 = vset.pattern.permute.xlu0 0
    %561 = vperm.xlu0 %560, %v551
    %v562 = vpop.permute.xlu0 %561
    %565 = vset.pattern.permute.xlu0 0
    %566 = vperm.xlu0 %565, %v552
    %v567 = vpop.permute.xlu0 %566
    %570 = vset.pattern.permute.xlu0 0
    %571 = vperm.xlu0 %570, %v553
    %v572 = vpop.permute.xlu0 %571
    %vm574 = vcmask 523264
    %v576 = vsel %vm574, %v519, 0
    %v579 = vsel %vm574, %v521, 0
    %v582 = vsel %vm574, %v523, 0
    %v585 = vsel %vm574, %v525, 0
    %587 = vmatprep.subr.mxu0 0.0
    %588 = vmatpush1.msra.mxu0 %v526
    %589 = vmatprep.subr.mxu0 0.0
    %590 = vmatpush1.msra.mxu0 %v527
    %591 = vmatprep.subr.mxu0 0.0
    %592 = vmatpush1.msra.mxu0 %v528
    %593 = vmatprep.subr.mxu0 0.0
    %594 = vmatpush1.msra.mxu0 %v529
    %595 = vmatprep.subr.mxu0 0.0
    %596 = vmatpush1.msra.mxu0 %v530
    %597 = vmatprep.subr.mxu0 0.0
    %598 = vmatpush1.msra.mxu0 %v531
    %599 = vmatprep.subr.mxu0 0.0
    %600 = vmatpush1.msra.mxu0 %v532
    %601 = vmatprep.subr.mxu0 0.0
    %602 = vmatpush1.msra.mxu0 %v533
    %603 = vmatprep.subr.mxu0 0.0
    %604 = vmatpush1.msra.mxu0 %v534
    %605 = vmatprep.subr.mxu0 0.0
    %606 = vmatpush1.msra.mxu0 %v535
    %607 = vmatprep.subr.mxu0 0.0
    %608 = vmatpush1.msra.mxu0 %v536
    %609 = vmatprep.subr.mxu0 0.0
    %610 = vmatpush1.msra.mxu0 %v537
    %611 = vmatprep.subr.mxu0 0.0
    %612 = vmatpush1.msra.mxu0 %v538
    %613 = vmatprep.subr.mxu0 0.0
    %614 = vmatpush1.msra.mxu0 %v539
    %615 = vmatprep.subr.mxu0 0.0
    %616 = vmatpush1.msra.mxu0 %v540
    %617 = vmatprep.subr.mxu0 0.0
    %618 = vmatpush1.msra.mxu0 %v541
    %619 = vmatprep.subr.mxu0 0.0
    %620 = vmatpush1.msra.mxu0 %v542
    %621 = vmatprep.subr.mxu0 0.0
    %622 = vmatpush1.msra.mxu0 %v543
    %623 = vmatprep.subr.mxu0 0.0
    %624 = vmatpush1.msra.mxu0 %v544
    %625 = vmatprep.subr.mxu0 0.0
    %626 = vmatpush1.msra.mxu0 %v545
    %627 = vmatprep.subr.mxu0 0.0
    %628 = vmatpush1.msra.mxu0 %v546
    %629 = vmatprep.subr.mxu0 0.0
    %630 = vmatpush1.msra.mxu0 %v547
    %631 = vmatprep.subr.mxu0 0.0
    %632 = vmatpush1.msra.mxu0 %v548
    %633 = vmatprep.subr.mxu0 0.0
    %634 = vmatpush1.msra.mxu0 %v549
    %635 = vmatprep.subr.mxu0 0.0
    %636 = vmatpush1.msra.mxu0 0.0
    %637 = vmatprep.subr.mxu0 0.0
    %638 = vmatpush1.msra.mxu0 0.0
    %639 = vmatprep.subr.mxu0 0.0
    %640 = vmatpush1.msra.mxu0 0.0
    %641 = vmatprep.subr.mxu0 0.0
    %642 = vmatpush1.msra.mxu0 0.0
    %643 = vmatprep.subr.mxu0 0.0
    %644 = vmatpush1.msra.mxu0 0.0
    %645 = vmatprep.subr.mxu0 0.0
    %646 = vmatpush1.msra.mxu0 0.0
    %647 = vmatprep.subr.mxu0 0.0
    %648 = vmatpush1.msra.mxu0 0.0
    %649 = vmatprep.subr.mxu0 0.0
    %650 = vmatpush1.msra.mxu0 0.0
    %651 = vmatprep.mubr.f32.mxu0 %v576
    %652 = vmatmul.mubr.f32.gmra.mrb[0].mxu0 %v518
    %v653 = vpop.f32.mrb[0].mxu0
    %v654 = vadd.f32 %v557, %v653
    %v655 = vpop.f32.mrb[0].mxu0
    %656 = vmatprep.mubr.f32.mxu0 %v579
    %657 = vmatmul.mubr.f32.gmra.mrb[0].mxu0 %v520
    %v658 = vpop.f32.mrb[0].mxu0
    %v659 = vadd.f32 %v562, %v658
    %v660 = vpop.f32.mrb[0].mxu0
    %661 = vmatprep.mubr.f32.mxu0 %v582
    %662 = vmatmul.mubr.f32.gmra.mrb[0].mxu0 %v522
    %v663 = vpop.f32.mrb[0].mxu0
    %v664 = vadd.f32 %v567, %v663
    %v665 = vpop.f32.mrb[0].mxu0
    %666 = vmatprep.mubr.f32.mxu0 %v585
    %667 = vmatmul.mubr.f32.gmra.mrb[0].mxu0 %v524
    %v668 = vpop.f32.mrb[0].mxu0
    %v669 = vadd.f32 %v572, %v668
    %v670 = vpop.f32.mrb[0].mxu0
    %671 = vdwg.mxu0
    %v672 = vmax.f32 %v654, 0.0
    %v673 = vmax.f32 %v659, 0.0
    %v674 = vmax.f32 %v664, 0.0
    %v675 = vmax.f32 %v669, 0.0
    %676 = vrot.lane.b32.xlu0 %v672, 1
    %v677 = vpop.permute.xlu0 %676
    %678 = vrot.lane.b32.xlu0 %v673, 1
    %v679 = vpop.permute.xlu0 %678
    %680 = vrot.lane.b32.xlu0 %v674, 1
    %v681 = vpop.permute.xlu0 %680
    %682 = vrot.lane.b32.xlu0 %v675, 1
    %v683 = vpop.permute.xlu0 %682
    %v684 = vmul.f32 %v677, %v52
    %v685 = vmul.f32 %v679, %v52
    %v686 = vmul.f32 %v681, %v52
    %v687 = vmul.f32 %v683, %v52
    %688 = vrot.lane.b32.xlu0 %v672, 127
    %v689 = vpop.permute.xlu0 %688
    %690 = vrot.lane.b32.xlu0 %v673, 127
    %v691 = vpop.permute.xlu0 %690
    %692 = vrot.lane.b32.xlu0 %v674, 127
    %v693 = vpop.permute.xlu0 %692
    %694 = vrot.lane.b32.xlu0 %v675, 127
    %v695 = vpop.permute.xlu0 %694
    %v696 = vmul.f32 %v689, %v55
    %v697 = vmul.f32 %v691, %v55
    %v698 = vmul.f32 %v693, %v55
    %v699 = vmul.f32 %v695, %v55
    %700 = vst [vmem:[#allocation2] sm:$0xff] %v684
    %701 = vst [vmem:[#allocation2 + $0x8] sm:$0xff] %v685
    %702 = vst [vmem:[#allocation2 + $0x10] sm:$0xff] %v686
    %703 = vst [vmem:[#allocation2 + $0x18] sm:$0xff] %v687
    %704 = vst [vmem:[#allocation2 + $0x20] sm:$0xff] %v672
    %705 = vst [vmem:[#allocation2 + $0x28] sm:$0xff] %v673
    %706 = vst [vmem:[#allocation2 + $0x30] sm:$0xff] %v674
    %707 = vst [vmem:[#allocation2 + $0x38] sm:$0xff] %v675
    %708 = vst [vmem:[#allocation2 + $0x40] sm:$0xff] %v696
    %709 = vst [vmem:[#allocation2 + $0x48] sm:$0xff] %v697
    %710 = vst [vmem:[#allocation2 + $0x50] sm:$0xff] %v698
    %711 = vst [vmem:[#allocation2 + $0x58] sm:$0xff] %v699
    %v712 = vld [vmem:[%s7] sm:$0x1]
    %v713 = vld [vmem:[#allocation2] sm:$0xff]
    %v714 = vld [vmem:[#allocation2 + $0x8] sm:$0xff]
    %v715 = vld [vmem:[#allocation2 + $0x10] sm:$0xff]
    %v716 = vld [vmem:[#allocation2 + $0x18] sm:$0xff]
    %v717 = vld [vmem:[#allocation2 + $0x20] sm:$0xff]
    %v718 = vld [vmem:[#allocation2 + $0x28] sm:$0xff]
    %v719 = vld [vmem:[#allocation2 + $0x30] sm:$0xff]
    %v720 = vld [vmem:[#allocation2 + $0x38] sm:$0xff]
    %v721 = vld [vmem:[#allocation2 + $0x40] sm:$0xff]
    %v722 = vld [vmem:[#allocation2 + $0x48] sm:$0xff]
    %v723 = vld [vmem:[#allocation2 + $0x50] sm:$0xff]
    %v724 = vld [vmem:[#allocation2 + $0x58] sm:$0xff]
    %v725 = vld [vmem:[#allocation3] sm:$0x1]
    %727 = vset.pattern.permute.xlu0 0
    %728 = vperm.xlu0 %727, %v725
    %v729 = vpop.permute.xlu0 %728
    %v731 = vlaneseq
    %v732 = vshrl.u32 %v731, 7
    %v733 = vsub.s32 0, %v732
    %v734 = vrot.slane %v729, %v733
    %v736 = vsel %vm308, %v712, 0
    %738 = vmatprep.subr.mxu0 0.0
    %739 = vmatpush1.msra.mxu0 %v713
    %740 = vmatprep.subr.mxu0 0.0
    %741 = vmatpush1.msra.mxu0 %v714
    %742 = vmatprep.subr.mxu0 0.0
    %743 = vmatpush1.msra.mxu0 %v715
    %744 = vmatprep.subr.mxu0 0.0
    %745 = vmatpush1.msra.mxu0 %v716
    %746 = vmatprep.subr.mxu0 0.0
    %747 = vmatpush1.msra.mxu0 %v717
    %748 = vmatprep.subr.mxu0 0.0
    %749 = vmatpush1.msra.mxu0 %v718
    %750 = vmatprep.subr.mxu0 0.0
    %751 = vmatpush1.msra.mxu0 %v719
    %752 = vmatprep.subr.mxu0 0.0
    %753 = vmatpush1.msra.mxu0 %v720
    %754 = vmatprep.subr.mxu0 0.0
    %755 = vmatpush1.msra.mxu0 %v721
    %756 = vmatprep.subr.mxu0 0.0
    %757 = vmatpush1.msra.mxu0 %v722
    %758 = vmatprep.subr.mxu0 0.0
    %759 = vmatpush1.msra.mxu0 %v723
    %760 = vmatprep.subr.mxu0 0.0
    %761 = vmatpush1.msra.mxu0 %v724
    %762 = vmatprep.subr.mxu0 0.0
    %763 = vmatpush1.msra.mxu0 0.0
    %764 = vmatprep.subr.mxu0 0.0
    %765 = vmatpush1.msra.mxu0 0.0
    %766 = vmatprep.subr.mxu0 0.0
    %767 = vmatpush1.msra.mxu0 0.0
    %768 = vmatprep.subr.mxu0 0.0
    %769 = vmatpush1.msra.mxu0 0.0
    %770 = vmatprep.subr.mxu0 0.0
    %771 = vmatpush1.msra.mxu0 0.0
    %772 = vmatprep.subr.mxu0 0.0
    %773 = vmatpush1.msra.mxu0 0.0
    %774 = vmatprep.subr.mxu0 0.0
    %775 = vmatpush1.msra.mxu0 0.0
    %776 = vmatprep.subr.mxu0 0.0
    %777 = vmatpush1.msra.mxu0 0.0
    %778 = vmatprep.subr.mxu0 0.0
    %779 = vmatpush1.msra.mxu0 0.0
    %780 = vmatprep.subr.mxu0 0.0
    %781 = vmatpush1.msra.mxu0 0.0
    %782 = vmatprep.subr.mxu0 0.0
    %783 = vmatpush1.msra.mxu0 0.0
    %784 = vmatprep.subr.mxu0 0.0
    %785 = vmatpush1.msra.mxu0 0.0
    %786 = vmatprep.subr.mxu0 0.0
    %787 = vmatpush1.msra.mxu0 0.0
    %788 = vmatprep.subr.mxu0 0.0
    %789 = vmatpush1.msra.mxu0 0.0
    %790 = vmatprep.subr.mxu0 0.0
    %791 = vmatpush1.msra.mxu0 0.0
    %792 = vmatprep.subr.mxu0 0.0
    %793 = vmatpush1.msra.mxu0 0.0
    %794 = vmatprep.subr.mxu0 0.0
    %795 = vmatpush1.msra.mxu0 0.0
    %796 = vmatprep.subr.mxu0 0.0
    %797 = vmatpush1.msra.mxu0 0.0
    %798 = vmatprep.subr.mxu0 0.0
    %799 = vmatpush1.msra.mxu0 0.0
    %800 = vmatprep.subr.mxu0 0.0
    %801 = vmatpush1.msra.mxu0 0.0
    %802 = vmatprep.mubr.f32.mxu0 0.0
    %803 = vmatmul.mubr.f32.gmra.mrb[0].mxu0 %v736
    %v804 = vpop.f32.mrb[0].mxu0
    %v805 = vadd.f32 %v734, %v804
    %v806 = vpop.f32.mrb[0].mxu0
    %807 = vdwg.mxu0
    %808 = vst [vmem:[#allocation4] sm:$0x1] %v805
    // Predicated region
    $region38: #{tpu_custom_call.1} parent=1 // pred_check
      _
    $region39: #{tpu_custom_call.1} parent=1 // pred_check_branch
      %810 = sbr.rel (0) target = $region41
    $region40: #{tpu_custom_call.1} parent=1 // pred_region
      %s812 = ssub.s32 16, 16
      %813 = vsyncadd [#allocation5], %s812
      %s815 = sshll.u32 [#allocation4], 4
      %s816 = int_to_ptr.vmem [resolvable:$true] %s815
      %818 = dma.vmem_to_hbm [thread:$0]  %s816, 16, %s9, [#allocation5]
    $region41: #{tpu_custom_call.1} parent=1 // pred_fallthru
      _
    // Predicated region
    $region42: #{tpu_custom_call.1} parent=1 // pred_check
      _
    $region43: #{tpu_custom_call.1} parent=1 // pred_check_branch
      %820 = sbr.rel (0) target = $region45
    $region44: #{tpu_custom_call.1} parent=1 // pred_region
      %821 = dma.done [#allocation5], 16
    $region45: #{tpu_custom_call.1} parent=1 // pred_fallthru
      _
    %822 = vsyncpa [#allocation5], 1

</llo_original>
